<compile_context>
chip_gen: v7x
topology: tpu7x:2x2x1
jax: 0.10.0
libtpu: 0.0.40
codegen_flags: <defaults>
</compile_context>

<pallas_src>
from functools import lru_cache

import jax
import jax.numpy as jnp
import numpy as np
from jax.experimental import pallas as pl
from jax.experimental.pallas import tpu as pltpu

_LANE = 128


# ----------------------------------------------------------------------------
# Host glue: bicubic interpolation weight matrix (out_size, in_size), a = -0.5.
# Memoized — it is a Python double loop plus an H2D upload otherwise repeated
# every call.
# ----------------------------------------------------------------------------
@lru_cache(maxsize=None)
def _bicubic_matrix_np(out_size: int, in_size: int) -> np.ndarray:
    a = -0.5
    scale = in_size / out_size

    def cubic(x):
        ax = np.abs(x)
        return np.where(
            ax <= 1.0,
            (a + 2.0) * ax**3 - (a + 3.0) * ax**2 + 1.0,
            np.where(ax < 2.0, a * ax**3 - 5.0 * a * ax**2 + 8.0 * a * ax - 4.0 * a, 0.0),
        )

    i = np.arange(out_size, dtype=np.float64)
    src = (i + 0.5) * scale - 0.5                    # half-pixel centers
    base = np.floor(src).astype(np.int64)
    frac = src - base
    offsets = np.arange(-1, 3)                       # 4 taps: base-1 .. base+2
    idx = base[:, None] + offsets[None, :]           # (out, 4)
    w = cubic(frac[:, None] - offsets[None, :])      # (out, 4)
    w = w / w.sum(axis=1, keepdims=True)
    idx = np.clip(idx, 0, in_size - 1)

    A = np.zeros((out_size, in_size), dtype=np.float64)
    for r in range(out_size):
        for t in range(4):
            A[r, idx[r, t]] += w[r, t]               # accumulate clamped taps
    return A.astype(np.float32)


@lru_cache(maxsize=None)
def _width_matrix_padded_np(new_w: int, W: int, new_wp: int) -> np.ndarray:
    """A_w^T padded with zero columns up to new_wp (lane-dense stores)."""
    awt = np.zeros((W, new_wp), dtype=np.float32)
    awt[:, :new_w] = _bicubic_matrix_np(new_w, W).T
    return awt


# ----------------------------------------------------------------------------
# Pallas kernel: B planes per step, two MXU matmuls over the whole block.
# ----------------------------------------------------------------------------
def _resize_kernel(ah_ref, awt_ref, x_ref, o_ref):
    B, H, W = x_ref.shape
    new_h = ah_ref.shape[0]
    new_wp = awt_ref.shape[1]

    x = x_ref[...].astype(jnp.float32)                           # (B, H, W)

    # Height pass: one batched matmul; shared A_h broadcast along B.
    ah_b = jnp.broadcast_to(ah_ref[...], (B, new_h, H))          # (B, new_h, H)
    t = jnp.einsum("boh,bhw->bow", ah_b, x,
                   preferred_element_type=jnp.float32)           # (B, new_h, W)

    # Width pass: fold B*new_h into one big matmul (leading-dim merge).
    y = jnp.dot(t.reshape(B * new_h, W), awt_ref[...],
                preferred_element_type=jnp.float32)              # (B*new_h, new_wp)

    o_ref[...] = y.reshape(B, new_h, new_wp).astype(o_ref.dtype)


def _pick_block_planes(NC: int, H: int, W: int, new_h: int, new_wp: int) -> int:
    """Planes per grid step, sized for the smallest default scoped-VMEM limit."""
    budget = 8 << 20                                 # ~half of v5e's 16 MiB default
    per_plane = 4 * (2 * H * W                       # double-buffered input tile
                     + 2 * new_h * new_wp            # double-buffered output tile
                     + new_h * W                     # intermediate t
                     + new_h * H)                    # broadcast A_h
    b = max(1, budget // max(per_plane, 1))
    b = min(b, 64, NC)
    if NC > 1:
        b = min(b, max(1, NC // 2))                  # grid >= 2: feed v7x's 2nd TC
    while NC % b:                                    # keep blocks exactly covering NC
        b -= 1
    return b


def height_width_longest_resize(img: jnp.ndarray, max_height: int, max_width: int):
    """img: (N, C, H, W) float32.  Returns (N, C, new_h, new_w) float32."""
    N, C, H, W = img.shape
    w, h = W, H                                      # PIL's img.size == (w, h)

    # --- exact size-selection semantics of the PyTorch/PIL module ---
    w_factor = max_width / w
    h_factor = max_height / h
    if w_factor < h_factor:
        new_w = max_width
        new_h = int(h * w_factor)
        assert new_h <= max_height
    else:
        new_h = max_height
        new_w = int(w * h_factor)
        assert new_w <= max_width
    # Guard degenerate aspect ratios (int() could yield 0).
    new_h = max(1, new_h)
    new_w = max(1, new_w)

    new_wp = ((new_w + _LANE - 1) // _LANE) * _LANE  # lane-dense output width

    ah = jnp.asarray(_bicubic_matrix_np(new_h, H))                 # (new_h, H)
    awt = jnp.asarray(_width_matrix_padded_np(new_w, W, new_wp))   # (W, new_wp)

    x_flat = img.reshape(N * C, H, W).astype(jnp.float32)
    NC = N * C
    B = _pick_block_planes(NC, H, W, new_h, new_wp)

    cost = pl.CostEstimate(
        flops=2 * NC * (new_h * H * W + new_h * W * new_wp),
        transcendentals=0,
        bytes_accessed=4 * (NC * H * W + NC * new_h * new_wp
                            + new_h * H + W * new_wp),
    )

    out = pl.pallas_call(
        _resize_kernel,
        out_shape=jax.ShapeDtypeStruct((NC, new_h, new_wp), jnp.float32),
        grid_spec=pltpu.PrefetchScalarGridSpec(
            num_scalar_prefetch=0,
            grid=(NC // B,),
            in_specs=[
                pl.BlockSpec((new_h, H), lambda i: (0, 0)),
                pl.BlockSpec((W, new_wp), lambda i: (0, 0)),
                pl.BlockSpec((B, H, W), lambda i: (i, 0, 0)),
            ],
            out_specs=pl.BlockSpec((B, new_h, new_wp), lambda i: (i, 0, 0)),
        ),
        compiler_params=pltpu.CompilerParams(dimension_semantics=("parallel",)),
        cost_estimate=cost,
    )(ah, awt, x_flat)

    if new_wp != new_w:
        out = out[:, :, :new_w]                      # drop zero lane padding
    return out.reshape(N, C, new_h, new_w)


if __name__ == "__main__":
    key = jax.random.PRNGKey(0)
    x = jax.random.uniform(key, (2, 4, 16, 16), dtype=jnp.float32)

    max_height, max_width = 8, 12
    y = height_width_longest_resize(x, max_height, max_width)
    y = jax.block_until_ready(y)

    # Silent correctness check vs. plain-JAX reference of the same math.
    H, W = x.shape[2], x.shape[3]
    new_h, new_w = y.shape[2], y.shape[3]
    ah = _bicubic_matrix_np(new_h, H)
    aw = _bicubic_matrix_np(new_w, W)
    ref = jnp.einsum("oh,nchw,pw->ncop", ah, x, aw)
    assert y.shape == (2, 4, new_h, new_w)
    assert jnp.allclose(y, ref, atol=1e-4, rtol=1e-4)

    print("KERNEL_OK")
</pallas_src>

<mosaic_0001>
module attributes {stable_mosaic.version = 11 : i64} {
  func.func @_resize_kernel(%arg0: i32, %arg1: memref<8x16xf32, #tpu.memory_space<vmem>>, %arg2: memref<16x128xf32, #tpu.memory_space<vmem>>, %arg3: memref<4x16x16xf32, #tpu.memory_space<vmem>>, %arg4: memref<4x8x128xf32, #tpu.memory_space<vmem>>) attributes {dimension_semantics = [#tpu.dimension_semantics<parallel>], iteration_bounds = array<i64: 2>, scalar_prefetch = 0 : i64, scratch_operands = 0 : i64, tpu.core_type = #tpu.core_type<tc>, window_params = [{pipeline_mode = #tpu.pipeline_mode<synchronous>, transform_indices = @transform_0, window_bounds = array<i64: 8, 16>}, {pipeline_mode = #tpu.pipeline_mode<synchronous>, transform_indices = @transform_1, window_bounds = array<i64: 16, 128>}, {transform_indices = @transform_2, window_bounds = array<i64: 4, 16, 16>}, {transform_indices = @transform_3, window_bounds = array<i64: 4, 8, 128>}]} {
    %c0 = arith.constant 0 : index
    %c0_0 = arith.constant 0 : index
    %c0_1 = arith.constant 0 : index
    %0 = vector.load %arg3[%c0, %c0_0, %c0_1] : memref<4x16x16xf32, #tpu.memory_space<vmem>>, vector<4x16x16xf32>
    %c0_2 = arith.constant 0 : index
    %c0_3 = arith.constant 0 : index
    %1 = vector.load %arg1[%c0_2, %c0_3] : memref<8x16xf32, #tpu.memory_space<vmem>>, vector<8x16xf32>
    %2 = vector.shape_cast %1 : vector<8x16xf32> to vector<1x8x16xf32>
    %3 = vector.broadcast %2 : vector<1x8x16xf32> to vector<4x8x16xf32>
    "tpu.trace_start"() <{level = 10 : i32, message = "boh,bhw->bow"}> : () -> ()
    %cst = arith.constant dense<0.000000e+00> : vector<4x8x16xf32>
    %4 = tpu.matmul %3, %0, %cst {dimension_numbers = #tpu.dot_dimension_numbers<[2], [1], [1], [2], [0, 0, 0, 1, 1, 2], [0], [0]>} : vector<4x8x16xf32>, vector<4x16x16xf32>, vector<4x8x16xf32> -> vector<4x8x16xf32>
    "tpu.trace_stop"() : () -> ()
    %5 = vector.shape_cast %4 : vector<4x8x16xf32> to vector<32x16xf32>
    %c0_4 = arith.constant 0 : index
    %c0_5 = arith.constant 0 : index
    %6 = vector.load %arg2[%c0_4, %c0_5] : memref<16x128xf32, #tpu.memory_space<vmem>>, vector<16x128xf32>
    %cst_6 = arith.constant dense<0.000000e+00> : vector<32x128xf32>
    %7 = tpu.matmul %5, %6, %cst_6 {dimension_numbers = #tpu.dot_dimension_numbers<[1], [0], [0], [1], [0, 0, 1, 1], [], []>} : vector<32x16xf32>, vector<16x128xf32>, vector<32x128xf32> -> vector<32x128xf32>
    %8 = vector.shape_cast %7 : vector<32x128xf32> to vector<4x8x128xf32>
    %c0_7 = arith.constant 0 : index
    %c0_8 = arith.constant 0 : index
    %c0_9 = arith.constant 0 : index
    %9 = vector.load %arg4[%c0_7, %c0_8, %c0_9] : memref<4x8x128xf32, #tpu.memory_space<vmem>>, vector<4x8x128xf32>
    tpu.vector_store %arg4[%c0_7, %c0_8, %c0_9], %8 {strides = array<i32>} : memref<4x8x128xf32, #tpu.memory_space<vmem>>, vector<4x8x128xf32>,
    return
  }
  func.func @transform_0(%arg0: i32) -> (i32, i32) {
    %c0_i32 = arith.constant 0 : i32
    %c0_i32_0 = arith.constant 0 : i32
    %c0_i32_1 = arith.constant 0 : i32
    return %c0_i32, %c0_i32_0 : i32, i32
  }
  func.func @transform_1(%arg0: i32) -> (i32, i32) {
    %c0_i32 = arith.constant 0 : i32
    %c0_i32_0 = arith.constant 0 : i32
    %c0_i32_1 = arith.constant 0 : i32
    return %c0_i32, %c0_i32_0 : i32, i32
  }
  func.func @transform_2(%arg0: i32) -> (i32, i32, i32) {
    %c0_i32 = arith.constant 0 : i32
    %c0_i32_0 = arith.constant 0 : i32
    %c0_i32_1 = arith.constant 0 : i32
    return %arg0, %c0_i32, %c0_i32_0 : i32, i32, i32
  }
  func.func @transform_3(%arg0: i32) -> (i32, i32, i32) {
    %c0_i32 = arith.constant 0 : i32
    %c0_i32_0 = arith.constant 0 : i32
    %c0_i32_1 = arith.constant 0 : i32
    return %arg0, %c0_i32, %c0_i32_0 : i32, i32, i32
  }
}

</mosaic_0001>

<llo_original>
// kernel: tpu_custom_call.1
$region0: #{tpu_custom_call.1}
  #allocation0 [shape = 'u32[]', space=smem, size = 0x4, offset = 0x4, fixed_abs, tag = 'smem constant byte address 0x4 - core index']
  #allocation1 [shape = 'u32[144,128]{1,0:T(1,128)}', space=vmem, size = 0x12000, scoped, tag = 'internal scratch']
  %s0 = inlined_call_operand.hbm [shape: f32[8,16], index: 0, kind: input, shape index: {}]
  %s1 = inlined_call_operand.hbm [shape: f32[16,128], index: 1, kind: input, shape index: {}]
  %s2 = inlined_call_operand.hbm [shape: f32[8,16,16], index: 2, kind: input, shape index: {}]
  %s3 = inlined_call_operand.hbm [shape: f32[8,8,128], index: 3, kind: output, shape index: {}]
  %s4 = sld [smem:[#allocation0]]
  $region57: #{tpu_custom_call.1} parent=0
    _
  %s6 = ssub.s32 1, %s4
  %s7 = scalar_select 0, %s6, %s4
  $region1: #{tpu_custom_call.1} parent=0
    #allocation2 [shape = 'u8[4096]{0}', space=vmem, size = 0x1000, scoped, tag = 'input window, operand 0, single buffered']
    #allocation3 [shape = 's32[2]{0}', space=sflag, size = 0x8, scoped, tag = 'scoped memory for tpu_custom_call.1']
    #allocation4 [shape = 's32[2]{0}', space=sflag, size = 0x8, scoped, tag = 'scoped memory for tpu_custom_call.1']
    #allocation5 [shape = 'u8[8192]{0}', space=vmem, size = 0x2000, scoped, tag = 'input window, operand 1, single buffered']
    #allocation6 [shape = 's32[1]{0}', space=sflag, size = 0x4, scoped, tag = 'scoped memory for tpu_custom_call.1']
    #allocation7 [shape = 'u8[65536]{0}', space=vmem, size = 0x10000, scoped, tag = 'input window, operand 2']
    #allocation8 [shape = 'u8[32768]{0}', space=vmem, size = 0x8000, scoped, tag = 'output window, operand 0']
    %8 = vsyncpa [#allocation3], 0
    %9 = vsyncpa [#allocation6], 0
    %10 = vsyncpa [#allocation4], 0
    %s11 = scalar_lea.sflag [#allocation4], 1
    %12 = vsyncpa %s11, 0
    loop: start=0, step=1, limit=4
    $region2: #{tpu_custom_call.1} parent=1 // loop_pre_header
      _
    $region3: #{tpu_custom_call.1} parent=1 // loop_header
      %s14 = sphi 0, %s18
      %p15 = scmp.ge.s32.totalorder %s14, 4
      %s22 = sphi 0, %s22
      %s24 = sphi 0, %s22
      %s25 = sphi 0, %s24
      %s39 = sphi 0, %s25
      %s43 = sphi 0, %s43
      %s45 = sphi 0, %s43
      %s46 = sphi 0, %s45
      %s60 = sphi 0, %s46
      %s66 = sphi 0, %s68
      %s69 = sphi 0, %s66
      %s70 = sphi 0, %s69
      %s86 = sphi 0, %s70
      %s92 = sphi 0, %s94
      %s95 = sphi 0, %s92
      %s96 = sphi 0, %s95
      %s112 = sphi 0, %s96
    $region4: #{tpu_custom_call.1} parent=1 // loop_header_branch
      %17 = sbr.rel (%p15) target = $region8
    $region5: #{tpu_custom_call.1} parent=1 // loop_body
      %s19 = ssub.s32 %s14, 1
      %s20 = ssub.s32 %s14, 2
      %s21 = sadd.s32 %s14, 1
      %s23 = sadd.s32 %s22, 1
      %p26 = scmp.eq.s32.totalorder %s14, 1
      %p27 = scmp.ne.s32.totalorder %s22, %s24
      %p28 = scmp.eq.s32.totalorder %s14, 0
      %p29 = por %p27, %p28
      %p30 = scmp.ne.s32.totalorder %s22, %s24
      %p31 = scmp.eq.s32.totalorder %s19, 1
      %p32 = por %p30, %p31
      %p33 = scmp.ne.s32.totalorder %s24, %s25
      %p34 = scmp.eq.s32.totalorder %s19, 0
      %p35 = por %p33, %p34
      %p36 = scmp.ne.s32.totalorder %s24, %s25
      %p37 = scmp.eq.s32.totalorder %s20, 1
      %p38 = por %p36, %p37
      %p40 = scmp.ne.s32.totalorder %s25, %s39
      %p41 = scmp.eq.s32.totalorder %s20, 0
      %p42 = por %p40, %p41
      %s44 = sadd.s32 %s43, 1
      %p47 = scmp.eq.s32.totalorder %s14, 1
      %p48 = scmp.ne.s32.totalorder %s43, %s45
      %p49 = scmp.eq.s32.totalorder %s14, 0
      %p50 = por %p48, %p49
      %p51 = scmp.ne.s32.totalorder %s43, %s45
      %p52 = scmp.eq.s32.totalorder %s19, 1
      %p53 = por %p51, %p52
      %p54 = scmp.ne.s32.totalorder %s45, %s46
      %p55 = scmp.eq.s32.totalorder %s19, 0
      %p56 = por %p54, %p55
      %p57 = scmp.ne.s32.totalorder %s45, %s46
      %p58 = scmp.eq.s32.totalorder %s20, 1
      %p59 = por %p57, %p58
      %p61 = scmp.ne.s32.totalorder %s46, %s60
      %p62 = scmp.eq.s32.totalorder %s20, 0
      %p63 = por %p61, %p62
      %s64 = ssub.s32 %s14, %s21
      %p65 = scmp.eq.s32.totalorder %s64, 0
      %s67 = sadd.s32 %s66, 1
      %s68 = scalar_select %p65, %s66, %s67
      %p71 = pneg %p65
      %p72 = scmp.eq.s32.totalorder %s14, 1
      %p73 = por %p71, %p72
      %p74 = scmp.ne.s32.totalorder %s66, %s69
      %p75 = scmp.eq.s32.totalorder %s14, 0
      %p76 = por %p74, %p75
      %p77 = scmp.ne.s32.totalorder %s66, %s69
      %p78 = scmp.eq.s32.totalorder %s19, 1
      %p79 = por %p77, %p78
      %p80 = scmp.ne.s32.totalorder %s69, %s70
      %p81 = scmp.eq.s32.totalorder %s19, 0
      %p82 = por %p80, %p81
      %p83 = scmp.ne.s32.totalorder %s69, %s70
      %p84 = scmp.eq.s32.totalorder %s20, 1
      %p85 = por %p83, %p84
      %p87 = scmp.ne.s32.totalorder %s70, %s86
      %p88 = scmp.eq.s32.totalorder %s20, 0
      %p89 = por %p87, %p88
      %s90 = ssub.s32 %s14, %s21
      %p91 = scmp.eq.s32.totalorder %s90, 0
      %s93 = sadd.s32 %s92, 1
      %s94 = scalar_select %p91, %s92, %s93
      %p97 = pneg %p91
      %p98 = scmp.eq.s32.totalorder %s14, 1
      %p99 = por %p97, %p98
      %p100 = scmp.ne.s32.totalorder %s92, %s95
      %p101 = scmp.eq.s32.totalorder %s14, 0
      %p102 = por %p100, %p101
      %p103 = scmp.ne.s32.totalorder %s92, %s95
      %p104 = scmp.eq.s32.totalorder %s19, 1
      %p105 = por %p103, %p104
      %p106 = scmp.ne.s32.totalorder %s95, %s96
      %p107 = scmp.eq.s32.totalorder %s19, 0
      %p108 = por %p106, %p107
      %p109 = scmp.ne.s32.totalorder %s95, %s96
      %p110 = scmp.eq.s32.totalorder %s20, 1
      %p111 = por %p109, %p110
      %p113 = scmp.ne.s32.totalorder %s96, %s112
      %p114 = scmp.eq.s32.totalorder %s20, 0
      %p115 = por %p113, %p114
      %p116 = scmp.le.s32.totalorder 1, %s14
      %p117 = scmp.lt.s32.totalorder %s14, 3
      %p118 = pnand %p116, %p117
      %p119 = pneg %p118
      // Predicated region
      $region9: #{tpu_custom_call.1} parent=5 // pred_check
        _
      $region10: #{tpu_custom_call.1} parent=5 // pred_check_branch
        %121 = sbr.rel (%p118) target = $region12
      $region11: #{tpu_custom_call.1} parent=5 // pred_region
        %s122 = ssub.s32 %s14, 1
        // Predicated region
        $region13: #{tpu_custom_call.1} parent=11 // pred_check
          %p123 = pneg %p35
        $region14: #{tpu_custom_call.1} parent=11 // pred_check_branch
          %125 = sbr.rel (%p123) target = $region16
        $region15: #{tpu_custom_call.1} parent=11 // pred_region
          %s127 = ssub.s32 128, 128
          %128 = vsyncadd [#allocation3], %s127
          %s130 = sshll.u32 [#allocation2], 4
          %s131 = int_to_ptr.vmem [resolvable:$true] %s130
          %133 = dma.hbm_to_vmem [thread:$0]  %s0, 128, %s131, [#allocation3]
        $region16: #{tpu_custom_call.1} parent=11 // pred_fallthru
          _
        // Predicated region
        $region17: #{tpu_custom_call.1} parent=11 // pred_check
          %p134 = pneg %p56
        $region18: #{tpu_custom_call.1} parent=11 // pred_check_branch
          %136 = sbr.rel (%p134) target = $region20
        $region19: #{tpu_custom_call.1} parent=11 // pred_region
          %s138 = ssub.s32 256, 256
          %139 = vsyncadd [#allocation6], %s138
          %s140 = sshll.u32 [#allocation5], 4
          %s141 = int_to_ptr.vmem [resolvable:$true] %s140
          %146 = dma.hbm_to_vmem [thread:$0]  %s1, 256, %s141, [#allocation6], 128, 128, 8
        $region20: #{tpu_custom_call.1} parent=11 // pred_fallthru
          _
      $region12: #{tpu_custom_call.1} parent=5 // pred_fallthru
        _
      %p147 = scmp.lt.s32.totalorder %s14, 2
      // Predicated region
      $region21: #{tpu_custom_call.1} parent=5 // pred_check
        %p148 = pneg %p147
      $region22: #{tpu_custom_call.1} parent=5 // pred_check_branch
        %150 = sbr.rel (%p148) target = $region24
      $region23: #{tpu_custom_call.1} parent=5 // pred_region
        // Predicated region
        $region25: #{tpu_custom_call.1} parent=23 // pred_check
          %p151 = pneg %p76
        $region26: #{tpu_custom_call.1} parent=23 // pred_check_branch
          %153 = sbr.rel (%p151) target = $region28
        $region27: #{tpu_custom_call.1} parent=23 // pred_region
          %s154 = sand.u32 %s14, 1
          %s155 = scalar_lea.sflag [#allocation3], %s154
          %s156 = sand.u32 %s66, 1
          %s157 = smul.addr %s156, 64
          %s158 = scalar_lea.vmem [#allocation7], %s157
          %s159 = smul.u32 4, %s14
          %s161 = ssub.s32 1024, 1024
          %162 = vsyncadd %s155, %s161
          %s163 = smul.addr %s159, 2
          %s164 = smul.addr %s163, 128
          %s165 = scalar_lea.hbm %s2, %s164
          %s166 = sshll.u32 %s158, 4
          %s167 = int_to_ptr.vmem [resolvable:$true] %s166
          %172 = dma.hbm_to_vmem [thread:$0]  %s165, 1024, %s167, %s155, 128, 128, 8
        $region28: #{tpu_custom_call.1} parent=23 // pred_fallthru
          _
      $region24: #{tpu_custom_call.1} parent=5 // pred_fallthru
        _
      %p173 = scmp.le.s32.totalorder 1, %s14
      %p174 = scmp.lt.s32.totalorder %s14, 3
      %p175 = pnand %p173, %p174
      %p176 = pneg %p175
      // Predicated region
      $region29: #{tpu_custom_call.1} parent=5 // pred_check
        _
      $region30: #{tpu_custom_call.1} parent=5 // pred_check_branch
        %178 = sbr.rel (%p175) target = $region32
      $region31: #{tpu_custom_call.1} parent=5 // pred_region
        %s179 = ssub.s32 %s14, 1
        // Predicated region
        $region33: #{tpu_custom_call.1} parent=31 // pred_check
          %p180 = pneg %p35
        $region34: #{tpu_custom_call.1} parent=31 // pred_check_branch
          %182 = sbr.rel (%p180) target = $region36
        $region35: #{tpu_custom_call.1} parent=31 // pred_region
          %183 = dma.done [#allocation3], 128
        $region36: #{tpu_custom_call.1} parent=31 // pred_fallthru
          _
        // Predicated region
        $region37: #{tpu_custom_call.1} parent=31 // pred_check
          %p184 = pneg %p56
        $region38: #{tpu_custom_call.1} parent=31 // pred_check_branch
          %186 = sbr.rel (%p184) target = $region40
        $region39: #{tpu_custom_call.1} parent=31 // pred_region
          %187 = dma.done [#allocation6], 256
        $region40: #{tpu_custom_call.1} parent=31 // pred_fallthru
          _
        %s188 = sand.u32 %s19, 1
        %s189 = scalar_lea.sflag [#allocation3], %s188
        %s190 = sand.u32 %s69, 1
        %s191 = smul.addr %s190, 64
        %s192 = scalar_lea.vmem [#allocation7], %s191
        // Predicated region
        $region41: #{tpu_custom_call.1} parent=31 // pred_check
          %p193 = pneg %p82
        $region42: #{tpu_custom_call.1} parent=31 // pred_check_branch
          %195 = sbr.rel (%p193) target = $region44
        $region43: #{tpu_custom_call.1} parent=31 // pred_region
          %196 = dma.done %s189, 1024
        $region44: #{tpu_custom_call.1} parent=31 // pred_fallthru
          _
        %p197 = pneg %p35
        %p198 = pneg %p32
        %p199 = pneg %p56
        %p200 = pneg %p53
        %s201 = sand.u32 %s19, 1
        %s202 = scalar_lea.sflag [#allocation3], %s201
        %s203 = sand.u32 %s69, 1
        %s204 = smul.addr %s203, 64
        %s205 = scalar_lea.vmem [#allocation7], %s204
        %p206 = pneg %p82
        %p207 = pneg %p79
        %p208 = pneg %p108
        %p209 = pneg %p105
        %s210 = sand.u32 %s95, 1
        %s211 = scalar_lea.sflag [#allocation4], %s210
        %s212 = sand.u32 %s95, 1
        %s213 = smul.addr %s212, 32
        %s214 = scalar_lea.vmem [#allocation8], %s213
        %s215 = smul.u32 4, %s19
        %s216 = smul.u32 4, %s19
        %v217 = vld [vmem:[%s192] sm:$0xff]
        %v218 = vld [vmem:[%s192 + $0x8] sm:$0xff]
        %v219 = vld [vmem:[%s192 + $0x10] sm:$0xff]
        %v220 = vld [vmem:[%s192 + $0x18] sm:$0xff]
        %v221 = vld [vmem:[%s192 + $0x20] sm:$0xff]
        %v222 = vld [vmem:[%s192 + $0x28] sm:$0xff]
        %v223 = vld [vmem:[%s192 + $0x30] sm:$0xff]
        %v224 = vld [vmem:[%s192 + $0x38] sm:$0xff]
        %v225 = vld [vmem:[#allocation2] sm:$0xff]
        %vm226 = vcmask 130048
        %v228 = vsel %vm226, %v225, 0
        %230 = vmatprep.subr.mxu0 0.0
        %231 = vmatpush1.msra.mxu0 %v217
        %232 = vmatprep.subr.mxu0 0.0
        %233 = vmatpush1.msra.mxu0 %v218
        %234 = vmatprep.subr.mxu0 0.0
        %235 = vmatpush1.msra.mxu0 0.0
        %236 = vmatprep.subr.mxu0 0.0
        %237 = vmatpush1.msra.mxu0 0.0
        %238 = vmatprep.subr.mxu0 0.0
        %239 = vmatpush1.msra.mxu0 0.0
        %240 = vmatprep.subr.mxu0 0.0
        %241 = vmatpush1.msra.mxu0 0.0
        %242 = vmatprep.subr.mxu0 0.0
        %243 = vmatpush1.msra.mxu0 0.0
        %244 = vmatprep.subr.mxu0 0.0
        %245 = vmatpush1.msra.mxu0 0.0
        %246 = vmatprep.subr.mxu0 0.0
        %247 = vmatpush1.msra.mxu0 0.0
        %248 = vmatprep.subr.mxu0 0.0
        %249 = vmatpush1.msra.mxu0 0.0
        %250 = vmatprep.subr.mxu0 0.0
        %251 = vmatpush1.msra.mxu0 0.0
        %252 = vmatprep.subr.mxu0 0.0
        %253 = vmatpush1.msra.mxu0 0.0
        %254 = vmatprep.subr.mxu0 0.0
        %255 = vmatpush1.msra.mxu0 0.0
        %256 = vmatprep.subr.mxu0 0.0
        %257 = vmatpush1.msra.mxu0 0.0
        %258 = vmatprep.subr.mxu0 0.0
        %259 = vmatpush1.msra.mxu0 0.0
        %260 = vmatprep.subr.mxu0 0.0
        %261 = vmatpush1.msra.mxu0 0.0
        %262 = vmatprep.subr.mxu0 0.0
        %263 = vmatpush1.msra.mxu0 0.0
        %264 = vmatprep.subr.mxu0 0.0
        %265 = vmatpush1.msra.mxu0 0.0
        %266 = vmatprep.subr.mxu0 0.0
        %267 = vmatpush1.msra.mxu0 0.0
        %268 = vmatprep.subr.mxu0 0.0
        %269 = vmatpush1.msra.mxu0 0.0
        %270 = vmatprep.subr.mxu0 0.0
        %271 = vmatpush1.msra.mxu0 0.0
        %272 = vmatprep.subr.mxu0 0.0
        %273 = vmatpush1.msra.mxu0 0.0
        %274 = vmatprep.subr.mxu0 0.0
        %275 = vmatpush1.msra.mxu0 0.0
        %276 = vmatprep.subr.mxu0 0.0
        %277 = vmatpush1.msra.mxu0 0.0
        %278 = vmatprep.subr.mxu0 0.0
        %279 = vmatpush1.msra.mxu0 0.0
        %280 = vmatprep.subr.mxu0 0.0
        %281 = vmatpush1.msra.mxu0 0.0
        %282 = vmatprep.subr.mxu0 0.0
        %283 = vmatpush1.msra.mxu0 0.0
        %284 = vmatprep.subr.mxu0 0.0
        %285 = vmatpush1.msra.mxu0 0.0
        %286 = vmatprep.subr.mxu0 0.0
        %287 = vmatpush1.msra.mxu0 0.0
        %288 = vmatprep.subr.mxu0 0.0
        %289 = vmatpush1.msra.mxu0 0.0
        %290 = vmatprep.subr.mxu0 0.0
        %291 = vmatpush1.msra.mxu0 0.0
        %292 = vmatprep.subr.mxu0 0.0
        %293 = vmatpush1.msra.mxu0 0.0
        %294 = vmatprep.mubr.f32.mxu0 0.0
        %295 = vmatmul.mubr.f32.gmra.mrb[0].mxu0 %v228
        %v296 = vpop.f32.mrb[0].mxu0
        %v297 = vadd.f32 0.0, %v296
        %v298 = vpop.f32.mrb[0].mxu0
        %299 = vdwg.mxu0
        %300 = vmatprep.subr.mxu0 0.0
        %301 = vmatpush1.msra.mxu0 %v219
        %302 = vmatprep.subr.mxu0 0.0
        %303 = vmatpush1.msra.mxu0 %v220
        %304 = vmatprep.subr.mxu0 0.0
        %305 = vmatpush1.msra.mxu0 0.0
        %306 = vmatprep.subr.mxu0 0.0
        %307 = vmatpush1.msra.mxu0 0.0
        %308 = vmatprep.subr.mxu0 0.0
        %309 = vmatpush1.msra.mxu0 0.0
        %310 = vmatprep.subr.mxu0 0.0
        %311 = vmatpush1.msra.mxu0 0.0
        %312 = vmatprep.subr.mxu0 0.0
        %313 = vmatpush1.msra.mxu0 0.0
        %314 = vmatprep.subr.mxu0 0.0
        %315 = vmatpush1.msra.mxu0 0.0
        %316 = vmatprep.subr.mxu0 0.0
        %317 = vmatpush1.msra.mxu0 0.0
        %318 = vmatprep.subr.mxu0 0.0
        %319 = vmatpush1.msra.mxu0 0.0
        %320 = vmatprep.subr.mxu0 0.0
        %321 = vmatpush1.msra.mxu0 0.0
        %322 = vmatprep.subr.mxu0 0.0
        %323 = vmatpush1.msra.mxu0 0.0
        %324 = vmatprep.subr.mxu0 0.0
        %325 = vmatpush1.msra.mxu0 0.0
        %326 = vmatprep.subr.mxu0 0.0
        %327 = vmatpush1.msra.mxu0 0.0
        %328 = vmatprep.subr.mxu0 0.0
        %329 = vmatpush1.msra.mxu0 0.0
        %330 = vmatprep.subr.mxu0 0.0
        %331 = vmatpush1.msra.mxu0 0.0
        %332 = vmatprep.subr.mxu0 0.0
        %333 = vmatpush1.msra.mxu0 0.0
        %334 = vmatprep.subr.mxu0 0.0
        %335 = vmatpush1.msra.mxu0 0.0
        %336 = vmatprep.subr.mxu0 0.0
        %337 = vmatpush1.msra.mxu0 0.0
        %338 = vmatprep.subr.mxu0 0.0
        %339 = vmatpush1.msra.mxu0 0.0
        %340 = vmatprep.subr.mxu0 0.0
        %341 = vmatpush1.msra.mxu0 0.0
        %342 = vmatprep.subr.mxu0 0.0
        %343 = vmatpush1.msra.mxu0 0.0
        %344 = vmatprep.subr.mxu0 0.0
        %345 = vmatpush1.msra.mxu0 0.0
        %346 = vmatprep.subr.mxu0 0.0
        %347 = vmatpush1.msra.mxu0 0.0
        %348 = vmatprep.subr.mxu0 0.0
        %349 = vmatpush1.msra.mxu0 0.0
        %350 = vmatprep.subr.mxu0 0.0
        %351 = vmatpush1.msra.mxu0 0.0
        %352 = vmatprep.subr.mxu0 0.0
        %353 = vmatpush1.msra.mxu0 0.0
        %354 = vmatprep.subr.mxu0 0.0
        %355 = vmatpush1.msra.mxu0 0.0
        %356 = vmatprep.subr.mxu0 0.0
        %357 = vmatpush1.msra.mxu0 0.0
        %358 = vmatprep.subr.mxu0 0.0
        %359 = vmatpush1.msra.mxu0 0.0
        %360 = vmatprep.subr.mxu0 0.0
        %361 = vmatpush1.msra.mxu0 0.0
        %362 = vmatprep.subr.mxu0 0.0
        %363 = vmatpush1.msra.mxu0 0.0
        %364 = vmatprep.mubr.f32.mxu0 0.0
        %365 = vmatmul.mubr.f32.gmra.mrb[0].mxu0 %v228
        %v366 = vpop.f32.mrb[0].mxu0
        %v367 = vadd.f32 0.0, %v366
        %v368 = vpop.f32.mrb[0].mxu0
        %369 = vdwg.mxu0
        %370 = vmatprep.subr.mxu0 0.0
        %371 = vmatpush1.msra.mxu0 %v221
        %372 = vmatprep.subr.mxu0 0.0
        %373 = vmatpush1.msra.mxu0 %v222
        %374 = vmatprep.subr.mxu0 0.0
        %375 = vmatpush1.msra.mxu0 0.0
        %376 = vmatprep.subr.mxu0 0.0
        %377 = vmatpush1.msra.mxu0 0.0
        %378 = vmatprep.subr.mxu0 0.0
        %379 = vmatpush1.msra.mxu0 0.0
        %380 = vmatprep.subr.mxu0 0.0
        %381 = vmatpush1.msra.mxu0 0.0
        %382 = vmatprep.subr.mxu0 0.0
        %383 = vmatpush1.msra.mxu0 0.0
        %384 = vmatprep.subr.mxu0 0.0
        %385 = vmatpush1.msra.mxu0 0.0
        %386 = vmatprep.subr.mxu0 0.0
        %387 = vmatpush1.msra.mxu0 0.0
        %388 = vmatprep.subr.mxu0 0.0
        %389 = vmatpush1.msra.mxu0 0.0
        %390 = vmatprep.subr.mxu0 0.0
        %391 = vmatpush1.msra.mxu0 0.0
        %392 = vmatprep.subr.mxu0 0.0
        %393 = vmatpush1.msra.mxu0 0.0
        %394 = vmatprep.subr.mxu0 0.0
        %395 = vmatpush1.msra.mxu0 0.0
        %396 = vmatprep.subr.mxu0 0.0
        %397 = vmatpush1.msra.mxu0 0.0
        %398 = vmatprep.subr.mxu0 0.0
        %399 = vmatpush1.msra.mxu0 0.0
        %400 = vmatprep.subr.mxu0 0.0
        %401 = vmatpush1.msra.mxu0 0.0
        %402 = vmatprep.subr.mxu0 0.0
        %403 = vmatpush1.msra.mxu0 0.0
        %404 = vmatprep.subr.mxu0 0.0
        %405 = vmatpush1.msra.mxu0 0.0
        %406 = vmatprep.subr.mxu0 0.0
        %407 = vmatpush1.msra.mxu0 0.0
        %408 = vmatprep.subr.mxu0 0.0
        %409 = vmatpush1.msra.mxu0 0.0
        %410 = vmatprep.subr.mxu0 0.0
        %411 = vmatpush1.msra.mxu0 0.0
        %412 = vmatprep.subr.mxu0 0.0
        %413 = vmatpush1.msra.mxu0 0.0
        %414 = vmatprep.subr.mxu0 0.0
        %415 = vmatpush1.msra.mxu0 0.0
        %416 = vmatprep.subr.mxu0 0.0
        %417 = vmatpush1.msra.mxu0 0.0
        %418 = vmatprep.subr.mxu0 0.0
        %419 = vmatpush1.msra.mxu0 0.0
        %420 = vmatprep.subr.mxu0 0.0
        %421 = vmatpush1.msra.mxu0 0.0
        %422 = vmatprep.subr.mxu0 0.0
        %423 = vmatpush1.msra.mxu0 0.0
        %424 = vmatprep.subr.mxu0 0.0
        %425 = vmatpush1.msra.mxu0 0.0
        %426 = vmatprep.subr.mxu0 0.0
        %427 = vmatpush1.msra.mxu0 0.0
        %428 = vmatprep.subr.mxu0 0.0
        %429 = vmatpush1.msra.mxu0 0.0
        %430 = vmatprep.subr.mxu0 0.0
        %431 = vmatpush1.msra.mxu0 0.0
        %432 = vmatprep.subr.mxu0 0.0
        %433 = vmatpush1.msra.mxu0 0.0
        %434 = vmatprep.mubr.f32.mxu0 0.0
        %435 = vmatmul.mubr.f32.gmra.mrb[0].mxu0 %v228
        %v436 = vpop.f32.mrb[0].mxu0
        %v437 = vadd.f32 0.0, %v436
        %v438 = vpop.f32.mrb[0].mxu0
        %439 = vdwg.mxu0
        %440 = vmatprep.subr.mxu0 0.0
        %441 = vmatpush1.msra.mxu0 %v223
        %442 = vmatprep.subr.mxu0 0.0
        %443 = vmatpush1.msra.mxu0 %v224
        %444 = vmatprep.subr.mxu0 0.0
        %445 = vmatpush1.msra.mxu0 0.0
        %446 = vmatprep.subr.mxu0 0.0
        %447 = vmatpush1.msra.mxu0 0.0
        %448 = vmatprep.subr.mxu0 0.0
        %449 = vmatpush1.msra.mxu0 0.0
        %450 = vmatprep.subr.mxu0 0.0
        %451 = vmatpush1.msra.mxu0 0.0
        %452 = vmatprep.subr.mxu0 0.0
        %453 = vmatpush1.msra.mxu0 0.0
        %454 = vmatprep.subr.mxu0 0.0
        %455 = vmatpush1.msra.mxu0 0.0
        %456 = vmatprep.subr.mxu0 0.0
        %457 = vmatpush1.msra.mxu0 0.0
        %458 = vmatprep.subr.mxu0 0.0
        %459 = vmatpush1.msra.mxu0 0.0
        %460 = vmatprep.subr.mxu0 0.0
        %461 = vmatpush1.msra.mxu0 0.0
        %462 = vmatprep.subr.mxu0 0.0
        %463 = vmatpush1.msra.mxu0 0.0
        %464 = vmatprep.subr.mxu0 0.0
        %465 = vmatpush1.msra.mxu0 0.0
        %466 = vmatprep.subr.mxu0 0.0
        %467 = vmatpush1.msra.mxu0 0.0
        %468 = vmatprep.subr.mxu0 0.0
        %469 = vmatpush1.msra.mxu0 0.0
        %470 = vmatprep.subr.mxu0 0.0
        %471 = vmatpush1.msra.mxu0 0.0
        %472 = vmatprep.subr.mxu0 0.0
        %473 = vmatpush1.msra.mxu0 0.0
        %474 = vmatprep.subr.mxu0 0.0
        %475 = vmatpush1.msra.mxu0 0.0
        %476 = vmatprep.subr.mxu0 0.0
        %477 = vmatpush1.msra.mxu0 0.0
        %478 = vmatprep.subr.mxu0 0.0
        %479 = vmatpush1.msra.mxu0 0.0
        %480 = vmatprep.subr.mxu0 0.0
        %481 = vmatpush1.msra.mxu0 0.0
        %482 = vmatprep.subr.mxu0 0.0
        %483 = vmatpush1.msra.mxu0 0.0
        %484 = vmatprep.subr.mxu0 0.0
        %485 = vmatpush1.msra.mxu0 0.0
        %486 = vmatprep.subr.mxu0 0.0
        %487 = vmatpush1.msra.mxu0 0.0
        %488 = vmatprep.subr.mxu0 0.0
        %489 = vmatpush1.msra.mxu0 0.0
        %490 = vmatprep.subr.mxu0 0.0
        %491 = vmatpush1.msra.mxu0 0.0
        %492 = vmatprep.subr.mxu0 0.0
        %493 = vmatpush1.msra.mxu0 0.0
        %494 = vmatprep.subr.mxu0 0.0
        %495 = vmatpush1.msra.mxu0 0.0
        %496 = vmatprep.subr.mxu0 0.0
        %497 = vmatpush1.msra.mxu0 0.0
        %498 = vmatprep.subr.mxu0 0.0
        %499 = vmatpush1.msra.mxu0 0.0
        %500 = vmatprep.subr.mxu0 0.0
        %501 = vmatpush1.msra.mxu0 0.0
        %502 = vmatprep.subr.mxu0 0.0
        %503 = vmatpush1.msra.mxu0 0.0
        %504 = vmatprep.mubr.f32.mxu0 0.0
        %505 = vmatmul.mubr.f32.gmra.mrb[0].mxu0 %v228
        %v506 = vpop.f32.mrb[0].mxu0
        %v507 = vadd.f32 0.0, %v506
        %v508 = vpop.f32.mrb[0].mxu0
        %509 = vdwg.mxu0
        %v510 = vld [vmem:[#allocation5] sm:$0xff]
        %v511 = vld [vmem:[#allocation5 + $0x8] sm:$0xff]
        %v513 = vsel %vm226, %v297, 0
        %v516 = vsel %vm226, %v367, 0
        %v519 = vsel %vm226, %v437, 0
        %v522 = vsel %vm226, %v507, 0
        %524 = vmatprep.subr.mxu0 0.0
        %525 = vmatpush1.msra.mxu0 %v510
        %526 = vmatprep.subr.mxu0 0.0
        %527 = vmatpush1.msra.mxu0 %v511
        %528 = vmatprep.subr.mxu0 0.0
        %529 = vmatpush1.msra.mxu0 0.0
        %530 = vmatprep.subr.mxu0 0.0
        %531 = vmatpush1.msra.mxu0 0.0
        %532 = vmatprep.subr.mxu0 0.0
        %533 = vmatpush1.msra.mxu0 0.0
        %534 = vmatprep.subr.mxu0 0.0
        %535 = vmatpush1.msra.mxu0 0.0
        %536 = vmatprep.subr.mxu0 0.0
        %537 = vmatpush1.msra.mxu0 0.0
        %538 = vmatprep.subr.mxu0 0.0
        %539 = vmatpush1.msra.mxu0 0.0
        %540 = vmatprep.subr.mxu0 0.0
        %541 = vmatpush1.msra.mxu0 0.0
        %542 = vmatprep.subr.mxu0 0.0
        %543 = vmatpush1.msra.mxu0 0.0
        %544 = vmatprep.subr.mxu0 0.0
        %545 = vmatpush1.msra.mxu0 0.0
        %546 = vmatprep.subr.mxu0 0.0
        %547 = vmatpush1.msra.mxu0 0.0
        %548 = vmatprep.subr.mxu0 0.0
        %549 = vmatpush1.msra.mxu0 0.0
        %550 = vmatprep.subr.mxu0 0.0
        %551 = vmatpush1.msra.mxu0 0.0
        %552 = vmatprep.subr.mxu0 0.0
        %553 = vmatpush1.msra.mxu0 0.0
        %554 = vmatprep.subr.mxu0 0.0
        %555 = vmatpush1.msra.mxu0 0.0
        %556 = vmatprep.subr.mxu0 0.0
        %557 = vmatpush1.msra.mxu0 0.0
        %558 = vmatprep.subr.mxu0 0.0
        %559 = vmatpush1.msra.mxu0 0.0
        %560 = vmatprep.subr.mxu0 0.0
        %561 = vmatpush1.msra.mxu0 0.0
        %562 = vmatprep.subr.mxu0 0.0
        %563 = vmatpush1.msra.mxu0 0.0
        %564 = vmatprep.subr.mxu0 0.0
        %565 = vmatpush1.msra.mxu0 0.0
        %566 = vmatprep.subr.mxu0 0.0
        %567 = vmatpush1.msra.mxu0 0.0
        %568 = vmatprep.subr.mxu0 0.0
        %569 = vmatpush1.msra.mxu0 0.0
        %570 = vmatprep.subr.mxu0 0.0
        %571 = vmatpush1.msra.mxu0 0.0
        %572 = vmatprep.subr.mxu0 0.0
        %573 = vmatpush1.msra.mxu0 0.0
        %574 = vmatprep.subr.mxu0 0.0
        %575 = vmatpush1.msra.mxu0 0.0
        %576 = vmatprep.subr.mxu0 0.0
        %577 = vmatpush1.msra.mxu0 0.0
        %578 = vmatprep.subr.mxu0 0.0
        %579 = vmatpush1.msra.mxu0 0.0
        %580 = vmatprep.subr.mxu0 0.0
        %581 = vmatpush1.msra.mxu0 0.0
        %582 = vmatprep.subr.mxu0 0.0
        %583 = vmatpush1.msra.mxu0 0.0
        %584 = vmatprep.subr.mxu0 0.0
        %585 = vmatpush1.msra.mxu0 0.0
        %586 = vmatprep.subr.mxu0 0.0
        %587 = vmatpush1.msra.mxu0 0.0
        %588 = vmatprep.mubr.f32.mxu0 0.0
        %589 = vmatmul.mubr.f32.gmra.mrb[0].mxu0 %v513
        %v590 = vpop.f32.mrb[0].mxu0
        %v591 = vadd.f32 0.0, %v590
        %v592 = vpop.f32.mrb[0].mxu0
        %593 = vmatprep.mubr.f32.mxu0 0.0
        %594 = vmatmul.mubr.f32.gmra.mrb[0].mxu0 %v516
        %v595 = vpop.f32.mrb[0].mxu0
        %v596 = vadd.f32 0.0, %v595
        %v597 = vpop.f32.mrb[0].mxu0
        %598 = vmatprep.mubr.f32.mxu0 0.0
        %599 = vmatmul.mubr.f32.gmra.mrb[0].mxu0 %v519
        %v600 = vpop.f32.mrb[0].mxu0
        %v601 = vadd.f32 0.0, %v600
        %v602 = vpop.f32.mrb[0].mxu0
        %603 = vmatprep.mubr.f32.mxu0 0.0
        %604 = vmatmul.mubr.f32.gmra.mrb[0].mxu0 %v522
        %v605 = vpop.f32.mrb[0].mxu0
        %v606 = vadd.f32 0.0, %v605
        %v607 = vpop.f32.mrb[0].mxu0
        %608 = vdwg.mxu0
        %609 = vst [vmem:[%s214] sm:$0xff] %v591
        %610 = vst [vmem:[%s214 + $0x8] sm:$0xff] %v596
        %611 = vst [vmem:[%s214 + $0x10] sm:$0xff] %v601
        %612 = vst [vmem:[%s214 + $0x18] sm:$0xff] %v606
        %s613 = sand.u32 %s95, 1
        %s614 = scalar_lea.sflag [#allocation4], %s613
        %s615 = sand.u32 %s95, 1
        %s616 = smul.addr %s615, 32
        %s617 = scalar_lea.vmem [#allocation8], %s616
        // Predicated region
        $region45: #{tpu_custom_call.1} parent=31 // pred_check
          %p618 = pneg %p105
        $region46: #{tpu_custom_call.1} parent=31 // pred_check_branch
          %620 = sbr.rel (%p618) target = $region48
        $region47: #{tpu_custom_call.1} parent=31 // pred_region
          %s621 = smul.u32 4, %s19
          %s623 = ssub.s32 512, 512
          %624 = vsyncadd %s614, %s623
          %s625 = smul.addr %s621, 128
          %s626 = scalar_lea.hbm %s3, %s625
          %s627 = sshll.u32 %s617, 4
          %s628 = int_to_ptr.vmem [resolvable:$true] %s627
          %633 = dma.vmem_to_hbm [thread:$0]  %s628, 512, %s626, %s614, 128, 128, 8
        $region48: #{tpu_custom_call.1} parent=31 // pred_fallthru
          _
      $region32: #{tpu_custom_call.1} parent=5 // pred_fallthru
        _
      %p634 = scmp.le.s32.totalorder 2, %s14
      // Predicated region
      $region49: #{tpu_custom_call.1} parent=5 // pred_check
        %p635 = pneg %p634
      $region50: #{tpu_custom_call.1} parent=5 // pred_check_branch
        %637 = sbr.rel (%p635) target = $region52
      $region51: #{tpu_custom_call.1} parent=5 // pred_region
        %s638 = ssub.s32 %s14, 2
        // Predicated region
        $region53: #{tpu_custom_call.1} parent=51 // pred_check
          %p639 = pneg %p111
        $region54: #{tpu_custom_call.1} parent=51 // pred_check_branch
          %641 = sbr.rel (%p639) target = $region56
        $region55: #{tpu_custom_call.1} parent=51 // pred_region
          %s642 = sand.u32 %s96, 1
          %s643 = scalar_lea.sflag [#allocation4], %s642
          %s644 = sand.u32 %s96, 1
          %s645 = smul.addr %s644, 32
          %s646 = scalar_lea.vmem [#allocation8], %s645
          %647 = dma.done %s643, 512
        $region56: #{tpu_custom_call.1} parent=51 // pred_fallthru
          _
      $region52: #{tpu_custom_call.1} parent=5 // pred_fallthru
        _
    $region6: #{tpu_custom_call.1} parent=1 // loop_footer
      %s18 = sadd.s32 1, %s14
    $region7: #{tpu_custom_call.1} parent=1 // loop_footer_branch
      %13 = sbr.rel target = $region3
    $region8: #{tpu_custom_call.1} parent=1 // loop_exit
      _
    %648 = vsyncpa [#allocation3], 1
    %s649 = scalar_lea.sflag [#allocation3], 1
    %650 = vsyncpa %s649, 1
    %651 = vsyncpa [#allocation6], 1
    %652 = vsyncpa [#allocation4], 1
    %s653 = scalar_lea.sflag [#allocation4], 1
    %654 = vsyncpa %s653, 1

</llo_original>
